<compile_context>
chip_gen: v6e
topology: v6e:2x2x1
jax: 0.10.0
libtpu: 0.0.40
codegen_flags: <defaults>
</compile_context>

<pallas_src>
import functools

import jax
import jax.numpy as jnp
from jax.experimental import pallas as pl
from jax.experimental.pallas import tpu as pltpu

EPS = 1e-6  # `eps` is a module-level global in the original file; fixed here.

_LANE = 128     # lane width (last dim)
_SUBLANE = 8    # f32 sublane width (second-to-last dim)


def _pad_to(n, m):
    return ((n + m - 1) // m) * m


def _inference_kernel(
    x_ref, z_ref,
    w_in_ref, b_in_ref,
    w_j_ref, b_j_ref,
    w_l0_ref, b_l0_ref,
    w_l1_ref, b_l1_ref,
    w_head_ref, b_head_ref,
    out_ref,
    joined_ref,
    *, hp: int, compute_dtype,
):
    f32 = jnp.float32
    cd = compute_dtype

    # embedded = tanh(input_lin(x_t))   -- bf16 x bf16 dot, f32 accumulation
    emb = jnp.tanh(
        jnp.dot(x_ref[...].astype(cd), w_in_ref[...],
                preferred_element_type=f32)
        + b_in_ref[...]
    )

    # joined = cat([embedded, z_prev], 1): two unmasked full-lane stores into a
    # (tile_b, 2*Hp) VMEM scratch, then ONE K=2*Hp contraction for joint_lin.
    joined_ref[:, :hp] = emb.astype(cd)
    joined_ref[:, hp:] = z_ref[...].astype(cd)
    h = jnp.tanh(
        jnp.dot(joined_ref[...], w_j_ref[...], preferred_element_type=f32)
        + b_j_ref[...]
    )

    # two hidden layers: linear -> tanh
    h = jnp.tanh(jnp.dot(h.astype(cd), w_l0_ref[...],
                         preferred_element_type=f32) + b_l0_ref[...])
    h = jnp.tanh(jnp.dot(h.astype(cd), w_l1_ref[...],
                         preferred_element_type=f32) + b_l1_ref[...])

    # fused heads: one (Hp, 2*Hp) matmul; activations on lane-aligned halves.
    pre = jnp.dot(h.astype(cd), w_head_ref[...],
                  preferred_element_type=f32) + b_head_ref[...]
    out_ref[:, :hp] = 10.0 * jnp.tanh(pre[:, :hp] / 10.0)     # mu
    out_ref[:, hp:] = jax.nn.sigmoid(pre[:, hp:]) + EPS       # sigma


def prepare_params(params, *, weight_dtype=jnp.bfloat16):
    """One-time weight prep: transpose to (in, out), fuse joint_lin into a
    single (2*Hp, Hp) weight (matching the lane layout of the in-kernel
    concat), fuse the mu/sigma heads, zero-pad to 128-lane multiples, and cast
    weights to `weight_dtype`.

    weight_dtype=jnp.bfloat16 (default) engages the bf16 MXU fast path on
    v5e/v6e/v7x: the kernel casts activations to the weight dtype immediately
    before each dot while accumulating in f32.  Pass jnp.float32 for a
    bit-tight (but ~3x slower MXU) path.
    """
    H = params["lin_mu_w"].shape[0]
    D = params["input_lin_w"].shape[1]
    Hp = _pad_to(H, _LANE)
    Dp = _pad_to(D, _LANE)

    def pad_w(w_t, rows, cols):  # w_t is already (in, out)
        return jnp.pad(w_t, ((0, rows - w_t.shape[0]),
                             (0, cols - w_t.shape[1]))).astype(weight_dtype)

    def pad_b(b, cols):          # biases stay f32 (added to the f32 accumulator)
        return jnp.pad(b, (0, cols - b.shape[0]))[None, :].astype(jnp.float32)

    w_j = params["joint_lin_w"].T       # (2H, H): rows [:H] act on embedded,
                                        #          rows [H:] act on z_prev
    prepared = {
        "w_in": pad_w(params["input_lin_w"].T, Dp, Hp),
        "b_in": pad_b(params["input_lin_b"], Hp),
        # joint layer fused: (2*Hp, Hp), rows [0:Hp] -> emb lanes, [Hp:] -> z lanes
        "w_j": jnp.concatenate([pad_w(w_j[:H, :], Hp, Hp),
                                pad_w(w_j[H:, :], Hp, Hp)], axis=0),
        "b_j": pad_b(params["joint_lin_b"], Hp),
        "w_l0": pad_w(params["layer0_w"].T, Hp, Hp),
        "b_l0": pad_b(params["layer0_b"], Hp),
        "w_l1": pad_w(params["layer1_w"].T, Hp, Hp),
        "b_l1": pad_b(params["layer1_b"], Hp),
        # fused mu|sigma head: (Hp, 2*Hp) weight, (1, 2*Hp) bias
        "w_head": jnp.concatenate(
            [pad_w(params["lin_mu_w"].T, Hp, Hp),
             pad_w(params["lin_sigma_w"].T, Hp, Hp)], axis=1),
        "b_head": jnp.concatenate(
            [pad_b(params["lin_mu_b"], Hp),
             pad_b(params["lin_sigma_b"], Hp)], axis=1),
    }
    return prepared


@jax.jit
def inference_forward(x_t, z_prev, prepared):
    """Inference forward pass as a single fused Pallas kernel.

    x_t:    (B, input_dim)  float32
    z_prev: (B, hidden_dim) float32
    prepared: output of `prepare_params`
    returns (mu, sigma), each (B, hidden_dim) float32
    """
    B, D = x_t.shape
    H = z_prev.shape[1]
    Hp = prepared["w_l0"].shape[0]
    Dp = prepared["w_in"].shape[0]
    compute_dtype = prepared["w_in"].dtype

    # Batch tiling: one tile when the batch is small; 256-row tiles otherwise so
    # the parallel grid axis can be sharded across v7x's two TensorCores.
    B8 = _pad_to(B, _SUBLANE)
    tile_b = B8 if B8 <= 256 else 256
    Bp = _pad_to(B, tile_b)

    # Pad activations only when actually needed (padded lanes/rows stay exactly
    # 0 through the tanh chain because padded weight rows/cols are 0).
    x_p = x_t if (Bp == B and Dp == D) else jnp.pad(
        x_t, ((0, Bp - B), (0, Dp - D)))
    z_p = z_prev if (Bp == B and Hp == H) else jnp.pad(
        z_prev, ((0, Bp - B), (0, Hp - H)))

    weight_args = (
        prepared["w_in"], prepared["b_in"],
        prepared["w_j"], prepared["b_j"],
        prepared["w_l0"], prepared["b_l0"],
        prepared["w_l1"], prepared["b_l1"],
        prepared["w_head"], prepared["b_head"],
    )
    inputs = (x_p, z_p) + weight_args

    # Activations / output tiled over the batch grid; weights use constant
    # index_maps so they stay VMEM-resident across all batch tiles.
    act_specs = [
        pl.BlockSpec((tile_b, Dp), lambda i: (i, 0)),
        pl.BlockSpec((tile_b, Hp), lambda i: (i, 0)),
    ]
    weight_specs = [pl.BlockSpec(w.shape, lambda i: (0, 0)) for w in weight_args]
    out_spec = pl.BlockSpec((tile_b, 2 * Hp), lambda i: (i, 0))

    # Advisory cost estimate so XLA can overlap this small custom call.
    flops = 2 * Bp * (Dp * Hp + 6 * Hp * Hp)
    transcendentals = 6 * Bp * Hp
    bytes_accessed = int(sum(a.size * a.dtype.itemsize for a in inputs)
                         + Bp * 2 * Hp * 4)

    # Explicit VMEM budget: whole weights (x2 for pipelining buffers) +
    # double-buffered activation/output tiles + the joined scratch.
    weight_bytes = sum(int(w.size) * w.dtype.itemsize for w in weight_args)
    io_bytes = 2 * 4 * (tile_b * Dp + tile_b * Hp + tile_b * 2 * Hp)
    scratch_bytes = tile_b * 2 * Hp * jnp.dtype(compute_dtype).itemsize
    vmem_needed = 2 * weight_bytes + io_bytes + scratch_bytes + (4 << 20)
    vmem_limit = int(min(max(vmem_needed, 32 << 20), 100 << 20))
    # TODO(synk): for hidden_dim where whole weights exceed physical VMEM
    # (~Hp>=2048 bf16 on v7x), tile layer weights over an output-column grid.

    out = pl.pallas_call(
        functools.partial(_inference_kernel, hp=Hp, compute_dtype=compute_dtype),
        out_shape=jax.ShapeDtypeStruct((Bp, 2 * Hp), jnp.float32),
        grid=(Bp // tile_b,),
        in_specs=act_specs + weight_specs,
        out_specs=out_spec,
        scratch_shapes=[pltpu.VMEM((tile_b, 2 * Hp), compute_dtype)],
        compiler_params=pltpu.CompilerParams(
            dimension_semantics=("parallel",),
            vmem_limit_bytes=vmem_limit,
        ),
        cost_estimate=pl.CostEstimate(
            flops=flops,
            transcendentals=transcendentals,
            bytes_accessed=bytes_accessed,
        ),
    )(*inputs)

    mu = out[:B, :H]
    sigma = out[:B, Hp:Hp + H]
    return mu, sigma


def init_params(key, input_dim, hidden_dim):
    """Deterministic init matching torch.nn.Linear shapes."""
    def linear(k, out_f, in_f):
        kw, kb = jax.random.split(k)
        bound = 1.0 / jnp.sqrt(in_f)
        w = jax.random.uniform(kw, (out_f, in_f), jnp.float32, -bound, bound)
        b = jax.random.uniform(kb, (out_f,), jnp.float32, -bound, bound)
        return w, b

    keys = jax.random.split(key, 6)
    p = {}
    p["input_lin_w"], p["input_lin_b"] = linear(keys[0], hidden_dim, input_dim)
    p["joint_lin_w"], p["joint_lin_b"] = linear(keys[1], hidden_dim, hidden_dim * 2)
    p["layer0_w"], p["layer0_b"] = linear(keys[2], hidden_dim, hidden_dim)
    p["layer1_w"], p["layer1_b"] = linear(keys[3], hidden_dim, hidden_dim)
    p["lin_mu_w"], p["lin_mu_b"] = linear(keys[4], hidden_dim, hidden_dim)
    p["lin_sigma_w"], p["lin_sigma_b"] = linear(keys[5], hidden_dim, hidden_dim)
    return p


def _reference_forward(x_t, z_prev, params):
    """Plain-JAX reference matching the PyTorch module exactly."""
    emb = jnp.tanh(x_t @ params["input_lin_w"].T + params["input_lin_b"])
    joined = jnp.concatenate([emb, z_prev], axis=1)
    h = jnp.tanh(joined @ params["joint_lin_w"].T + params["joint_lin_b"])
    h = jnp.tanh(h @ params["layer0_w"].T + params["layer0_b"])
    h = jnp.tanh(h @ params["layer1_w"].T + params["layer1_b"])
    mu = 10.0 * jnp.tanh((h @ params["lin_mu_w"].T + params["lin_mu_b"]) / 10.0)
    sigma = jax.nn.sigmoid(h @ params["lin_sigma_w"].T + params["lin_sigma_b"]) + EPS
    return mu, sigma


if __name__ == "__main__":
    batch = 8
    input_dim = 16
    hidden_dim = 32

    key = jax.random.PRNGKey(0)
    k_params, k_x, k_z = jax.random.split(key, 3)

    params = init_params(k_params, input_dim, hidden_dim)
    x_t = jax.random.normal(k_x, (batch, input_dim), jnp.float32)
    z_prev = jax.random.normal(k_z, (batch, hidden_dim), jnp.float32)

    mu_ref, sigma_ref = _reference_forward(x_t, z_prev, params)

    # f32-weight path: exact semantics, tight tolerance.
    prepared_f32 = prepare_params(params, weight_dtype=jnp.float32)
    mu, sigma = inference_forward(x_t, z_prev, prepared_f32)
    jax.block_until_ready((mu, sigma))
    assert jnp.allclose(mu, mu_ref, atol=1e-5, rtol=1e-5)
    assert jnp.allclose(sigma, sigma_ref, atol=1e-5, rtol=1e-5)

    # bf16 fast path: bf16 x bf16 dots with f32 accumulation; looser tolerance
    # reflects bf16 weight/activation rounding only (not a semantics change).
    prepared_bf16 = prepare_params(params, weight_dtype=jnp.bfloat16)
    mu_b, sigma_b = inference_forward(x_t, z_prev, prepared_bf16)
    jax.block_until_ready((mu_b, sigma_b))
    assert jnp.allclose(mu_b, mu_ref, atol=1e-1, rtol=1e-1)
    assert jnp.allclose(sigma_b, sigma_ref, atol=1e-1, rtol=1e-1)

    print("KERNEL_OK")
</pallas_src>

<mosaic_0001>
module attributes {stable_mosaic.version = 11 : i64} {
  func.func @_inference_kernel(%arg0: i32, %arg1: memref<8x128xf32, #tpu.memory_space<vmem>>, %arg2: memref<8x128xf32, #tpu.memory_space<vmem>>, %arg3: memref<128x128xf32, #tpu.memory_space<vmem>>, %arg4: memref<1x128xf32, #tpu.memory_space<vmem>>, %arg5: memref<256x128xf32, #tpu.memory_space<vmem>>, %arg6: memref<1x128xf32, #tpu.memory_space<vmem>>, %arg7: memref<128x128xf32, #tpu.memory_space<vmem>>, %arg8: memref<1x128xf32, #tpu.memory_space<vmem>>, %arg9: memref<128x128xf32, #tpu.memory_space<vmem>>, %arg10: memref<1x128xf32, #tpu.memory_space<vmem>>, %arg11: memref<128x256xf32, #tpu.memory_space<vmem>>, %arg12: memref<1x256xf32, #tpu.memory_space<vmem>>, %arg13: memref<8x256xf32, #tpu.memory_space<vmem>>, %arg14: memref<8x256xf32, #tpu.memory_space<vmem>>) attributes {dimension_semantics = [#tpu.dimension_semantics<parallel>], iteration_bounds = array<i64: 1>, scalar_prefetch = 0 : i64, scratch_operands = 1 : i64, tpu.core_type = #tpu.core_type<tc>, window_params = [{transform_indices = @transform_0, window_bounds = array<i64: 8, 128>}, {transform_indices = @transform_1, window_bounds = array<i64: 8, 128>}, {pipeline_mode = #tpu.pipeline_mode<synchronous>, transform_indices = @transform_2, window_bounds = array<i64: 128, 128>}, {pipeline_mode = #tpu.pipeline_mode<synchronous>, transform_indices = @transform_3, window_bounds = array<i64: 1, 128>}, {pipeline_mode = #tpu.pipeline_mode<synchronous>, transform_indices = @transform_4, window_bounds = array<i64: 256, 128>}, {pipeline_mode = #tpu.pipeline_mode<synchronous>, transform_indices = @transform_5, window_bounds = array<i64: 1, 128>}, {pipeline_mode = #tpu.pipeline_mode<synchronous>, transform_indices = @transform_6, window_bounds = array<i64: 128, 128>}, {pipeline_mode = #tpu.pipeline_mode<synchronous>, transform_indices = @transform_7, window_bounds = array<i64: 1, 128>}, {pipeline_mode = #tpu.pipeline_mode<synchronous>, transform_indices = @transform_8, window_bounds = array<i64: 128, 128>}, {pipeline_mode = #tpu.pipeline_mode<synchronous>, transform_indices = @transform_9, window_bounds = array<i64: 1, 128>}, {pipeline_mode = #tpu.pipeline_mode<synchronous>, transform_indices = @transform_10, window_bounds = array<i64: 128, 256>}, {pipeline_mode = #tpu.pipeline_mode<synchronous>, transform_indices = @transform_11, window_bounds = array<i64: 1, 256>}, {transform_indices = @transform_12, window_bounds = array<i64: 8, 256>}]} {
    %c0 = arith.constant 0 : index
    %c0_0 = arith.constant 0 : index
    %0 = vector.load %arg1[%c0, %c0_0] : memref<8x128xf32, #tpu.memory_space<vmem>>, vector<8x128xf32>
    %c0_1 = arith.constant 0 : index
    %c0_2 = arith.constant 0 : index
    %1 = vector.load %arg3[%c0_1, %c0_2] : memref<128x128xf32, #tpu.memory_space<vmem>>, vector<128x128xf32>
    %cst = arith.constant dense<0.000000e+00> : vector<8x128xf32>
    %2 = tpu.matmul %0, %1, %cst {dimension_numbers = #tpu.dot_dimension_numbers<[1], [0], [0], [1], [0, 0, 1, 1], [], []>} : vector<8x128xf32>, vector<128x128xf32>, vector<8x128xf32> -> vector<8x128xf32>
    %c0_3 = arith.constant 0 : index
    %c0_4 = arith.constant 0 : index
    %3 = vector.load %arg4[%c0_3, %c0_4] : memref<1x128xf32, #tpu.memory_space<vmem>>, vector<1x128xf32>
    %4 = vector.broadcast %3 : vector<1x128xf32> to vector<8x128xf32>
    %5 = arith.addf %2, %4 : vector<8x128xf32>
    %6 = math.tanh %5 : vector<8x128xf32>
    %c0_5 = arith.constant 0 : index
    %c0_6 = arith.constant 0 : index
    %7 = vector.load %arg14[%c0_5, %c0_6] : memref<8x256xf32, #tpu.memory_space<vmem>>, vector<8x128xf32>
    tpu.vector_store %arg14[%c0_5, %c0_6], %6 {strides = array<i32>} : memref<8x256xf32, #tpu.memory_space<vmem>>, vector<8x128xf32>,
    %c0_7 = arith.constant 0 : index
    %c0_8 = arith.constant 0 : index
    %8 = vector.load %arg2[%c0_7, %c0_8] : memref<8x128xf32, #tpu.memory_space<vmem>>, vector<8x128xf32>
    %c0_9 = arith.constant 0 : index
    %c128 = arith.constant 128 : index
    %9 = vector.load %arg14[%c0_9, %c128] : memref<8x256xf32, #tpu.memory_space<vmem>>, vector<8x128xf32>
    tpu.vector_store %arg14[%c0_9, %c128], %8 {strides = array<i32>} : memref<8x256xf32, #tpu.memory_space<vmem>>, vector<8x128xf32>,
    %c0_10 = arith.constant 0 : index
    %c0_11 = arith.constant 0 : index
    %10 = vector.load %arg14[%c0_10, %c0_11] : memref<8x256xf32, #tpu.memory_space<vmem>>, vector<8x256xf32>
    %c0_12 = arith.constant 0 : index
    %c0_13 = arith.constant 0 : index
    %11 = vector.load %arg5[%c0_12, %c0_13] : memref<256x128xf32, #tpu.memory_space<vmem>>, vector<256x128xf32>
    %cst_14 = arith.constant dense<0.000000e+00> : vector<8x128xf32>
    %12 = tpu.matmul %10, %11, %cst_14 {dimension_numbers = #tpu.dot_dimension_numbers<[1], [0], [0], [1], [0, 0, 1, 1], [], []>} : vector<8x256xf32>, vector<256x128xf32>, vector<8x128xf32> -> vector<8x128xf32>
    %c0_15 = arith.constant 0 : index
    %c0_16 = arith.constant 0 : index
    %13 = vector.load %arg6[%c0_15, %c0_16] : memref<1x128xf32, #tpu.memory_space<vmem>>, vector<1x128xf32>
    %14 = vector.broadcast %13 : vector<1x128xf32> to vector<8x128xf32>
    %15 = arith.addf %12, %14 : vector<8x128xf32>
    %16 = math.tanh %15 : vector<8x128xf32>
    %c0_17 = arith.constant 0 : index
    %c0_18 = arith.constant 0 : index
    %17 = vector.load %arg7[%c0_17, %c0_18] : memref<128x128xf32, #tpu.memory_space<vmem>>, vector<128x128xf32>
    %cst_19 = arith.constant dense<0.000000e+00> : vector<8x128xf32>
    %18 = tpu.matmul %16, %17, %cst_19 {dimension_numbers = #tpu.dot_dimension_numbers<[1], [0], [0], [1], [0, 0, 1, 1], [], []>} : vector<8x128xf32>, vector<128x128xf32>, vector<8x128xf32> -> vector<8x128xf32>
    %c0_20 = arith.constant 0 : index
    %c0_21 = arith.constant 0 : index
    %19 = vector.load %arg8[%c0_20, %c0_21] : memref<1x128xf32, #tpu.memory_space<vmem>>, vector<1x128xf32>
    %20 = vector.broadcast %19 : vector<1x128xf32> to vector<8x128xf32>
    %21 = arith.addf %18, %20 : vector<8x128xf32>
    %22 = math.tanh %21 : vector<8x128xf32>
    %c0_22 = arith.constant 0 : index
    %c0_23 = arith.constant 0 : index
    %23 = vector.load %arg9[%c0_22, %c0_23] : memref<128x128xf32, #tpu.memory_space<vmem>>, vector<128x128xf32>
    %cst_24 = arith.constant dense<0.000000e+00> : vector<8x128xf32>
    %24 = tpu.matmul %22, %23, %cst_24 {dimension_numbers = #tpu.dot_dimension_numbers<[1], [0], [0], [1], [0, 0, 1, 1], [], []>} : vector<8x128xf32>, vector<128x128xf32>, vector<8x128xf32> -> vector<8x128xf32>
    %c0_25 = arith.constant 0 : index
    %c0_26 = arith.constant 0 : index
    %25 = vector.load %arg10[%c0_25, %c0_26] : memref<1x128xf32, #tpu.memory_space<vmem>>, vector<1x128xf32>
    %26 = vector.broadcast %25 : vector<1x128xf32> to vector<8x128xf32>
    %27 = arith.addf %24, %26 : vector<8x128xf32>
    %28 = math.tanh %27 : vector<8x128xf32>
    %c0_27 = arith.constant 0 : index
    %c0_28 = arith.constant 0 : index
    %29 = vector.load %arg11[%c0_27, %c0_28] : memref<128x256xf32, #tpu.memory_space<vmem>>, vector<128x256xf32>
    %cst_29 = arith.constant dense<0.000000e+00> : vector<8x256xf32>
    %30 = tpu.matmul %28, %29, %cst_29 {dimension_numbers = #tpu.dot_dimension_numbers<[1], [0], [0], [1], [0, 0, 1, 1], [], []>} : vector<8x128xf32>, vector<128x256xf32>, vector<8x256xf32> -> vector<8x256xf32>
    %c0_30 = arith.constant 0 : index
    %c0_31 = arith.constant 0 : index
    %31 = vector.load %arg12[%c0_30, %c0_31] : memref<1x256xf32, #tpu.memory_space<vmem>>, vector<1x256xf32>
    %32 = vector.broadcast %31 : vector<1x256xf32> to vector<8x256xf32>
    %33 = arith.addf %30, %32 : vector<8x256xf32>
    %34 = vector.extract_strided_slice %33 {offsets = [0, 0], sizes = [8, 128], strides = [1, 1]} : vector<8x256xf32> to vector<8x128xf32>
    %cst_32 = arith.constant 1.000000e+01 : f32
    %35 = vector.broadcast %cst_32 : f32 to vector<8x128xf32>
    %36 = arith.divf %34, %35 : vector<8x128xf32>
    %37 = math.tanh %36 : vector<8x128xf32>
    %cst_33 = arith.constant 1.000000e+01 : f32
    %38 = vector.broadcast %cst_33 : f32 to vector<8x128xf32>
    %39 = arith.mulf %38, %37 : vector<8x128xf32>
    %c0_34 = arith.constant 0 : index
    %c0_35 = arith.constant 0 : index
    %40 = vector.load %arg13[%c0_34, %c0_35] : memref<8x256xf32, #tpu.memory_space<vmem>>, vector<8x128xf32>
    tpu.vector_store %arg13[%c0_34, %c0_35], %39 {strides = array<i32>} : memref<8x256xf32, #tpu.memory_space<vmem>>, vector<8x128xf32>,
    %41 = vector.extract_strided_slice %33 {offsets = [0, 128], sizes = [8, 128], strides = [1, 1]} : vector<8x256xf32> to vector<8x128xf32>
    %42 = arith.negf %41 : vector<8x128xf32>
    %43 = math.exp %42 : vector<8x128xf32>
    %cst_36 = arith.constant 1.000000e+00 : f32
    %44 = vector.broadcast %cst_36 : f32 to vector<8x128xf32>
    %45 = arith.addf %44, %43 : vector<8x128xf32>
    %46 = arith.divf %44, %45 : vector<8x128xf32>
    %cst_37 = arith.constant 9.99999997E-7 : f32
    %47 = vector.broadcast %cst_37 : f32 to vector<8x128xf32>
    %48 = arith.addf %46, %47 : vector<8x128xf32>
    %c0_38 = arith.constant 0 : index
    %c128_39 = arith.constant 128 : index
    %49 = vector.load %arg13[%c0_38, %c128_39] : memref<8x256xf32, #tpu.memory_space<vmem>>, vector<8x128xf32>
    tpu.vector_store %arg13[%c0_38, %c128_39], %48 {strides = array<i32>} : memref<8x256xf32, #tpu.memory_space<vmem>>, vector<8x128xf32>,
    return
  }
  func.func @transform_0(%arg0: i32) -> (i32, i32) {
    %c0_i32 = arith.constant 0 : i32
    %c0_i32_0 = arith.constant 0 : i32
    return %arg0, %c0_i32 : i32, i32
  }
  func.func @transform_1(%arg0: i32) -> (i32, i32) {
    %c0_i32 = arith.constant 0 : i32
    %c0_i32_0 = arith.constant 0 : i32
    return %arg0, %c0_i32 : i32, i32
  }
  func.func @transform_2(%arg0: i32) -> (i32, i32) {
    %c0_i32 = arith.constant 0 : i32
    %c0_i32_0 = arith.constant 0 : i32
    %c0_i32_1 = arith.constant 0 : i32
    return %c0_i32, %c0_i32_0 : i32, i32
  }
  func.func @transform_3(%arg0: i32) -> (i32, i32) {
    %c0_i32 = arith.constant 0 : i32
    %c0_i32_0 = arith.constant 0 : i32
    %c0_i32_1 = arith.constant 0 : i32
    return %c0_i32, %c0_i32_0 : i32, i32
  }
  func.func @transform_4(%arg0: i32) -> (i32, i32) {
    %c0_i32 = arith.constant 0 : i32
    %c0_i32_0 = arith.constant 0 : i32
    %c0_i32_1 = arith.constant 0 : i32
    return %c0_i32, %c0_i32_0 : i32, i32
  }
  func.func @transform_5(%arg0: i32) -> (i32, i32) {
    %c0_i32 = arith.constant 0 : i32
    %c0_i32_0 = arith.constant 0 : i32
    %c0_i32_1 = arith.constant 0 : i32
    return %c0_i32, %c0_i32_0 : i32, i32
  }
  func.func @transform_6(%arg0: i32) -> (i32, i32) {
    %c0_i32 = arith.constant 0 : i32
    %c0_i32_0 = arith.constant 0 : i32
    %c0_i32_1 = arith.constant 0 : i32
    return %c0_i32, %c0_i32_0 : i32, i32
  }
  func.func @transform_7(%arg0: i32) -> (i32, i32) {
    %c0_i32 = arith.constant 0 : i32
    %c0_i32_0 = arith.constant 0 : i32
    %c0_i32_1 = arith.constant 0 : i32
    return %c0_i32, %c0_i32_0 : i32, i32
  }
  func.func @transform_8(%arg0: i32) -> (i32, i32) {
    %c0_i32 = arith.constant 0 : i32
    %c0_i32_0 = arith.constant 0 : i32
    %c0_i32_1 = arith.constant 0 : i32
    return %c0_i32, %c0_i32_0 : i32, i32
  }
  func.func @transform_9(%arg0: i32) -> (i32, i32) {
    %c0_i32 = arith.constant 0 : i32
    %c0_i32_0 = arith.constant 0 : i32
    %c0_i32_1 = arith.constant 0 : i32
    return %c0_i32, %c0_i32_0 : i32, i32
  }
  func.func @transform_10(%arg0: i32) -> (i32, i32) {
    %c0_i32 = arith.constant 0 : i32
    %c0_i32_0 = arith.constant 0 : i32
    %c0_i32_1 = arith.constant 0 : i32
    return %c0_i32, %c0_i32_0 : i32, i32
  }
  func.func @transform_11(%arg0: i32) -> (i32, i32) {
    %c0_i32 = arith.constant 0 : i32
    %c0_i32_0 = arith.constant 0 : i32
    %c0_i32_1 = arith.constant 0 : i32
    return %c0_i32, %c0_i32_0 : i32, i32
  }
  func.func @transform_12(%arg0: i32) -> (i32, i32) {
    %c0_i32 = arith.constant 0 : i32
    %c0_i32_0 = arith.constant 0 : i32
    return %arg0, %c0_i32 : i32, i32
  }
}

</mosaic_0001>

<llo_original>
// kernel: inference_forward.1
$region0: #{inference_forward.1}
  #allocation0 [shape = 'u32[]', space=smem, size = 0x4, offset = 0x4, fixed_abs, tag = 'smem constant byte address 0x4 - core index']
  #allocation1 [shape = 'u32[144,128]{1,0:T(1,128)}', space=vmem, size = 0x12000, scoped, tag = 'internal scratch']
  #allocation2 [shape = 'f32[8,256]{1,0:T(8,128)}', space=vmem, size = 0x2000, scoped, tag = 'scratch operand']
  %s0 = inlined_call_operand.vmem [shape: f32[8,128], index: 0, kind: input, shape index: {}]
  %s1 = inlined_call_operand.vmem [shape: f32[8,128], index: 1, kind: input, shape index: {}]
  %s2 = inlined_call_operand.hbm [shape: f32[128,128], index: 2, kind: input, shape index: {}]
  %s3 = inlined_call_operand.vmem [shape: f32[1,128], index: 3, kind: input, shape index: {}]
  %s4 = inlined_call_operand.hbm [shape: f32[256,128], index: 4, kind: input, shape index: {}]
  %s5 = inlined_call_operand.vmem [shape: f32[1,128], index: 5, kind: input, shape index: {}]
  %s6 = inlined_call_operand.hbm [shape: f32[128,128], index: 6, kind: input, shape index: {}]
  %s7 = inlined_call_operand.vmem [shape: f32[1,128], index: 7, kind: input, shape index: {}]
  %s8 = inlined_call_operand.hbm [shape: f32[128,128], index: 8, kind: input, shape index: {}]
  %s9 = inlined_call_operand.vmem [shape: f32[1,128], index: 9, kind: input, shape index: {}]
  %s10 = inlined_call_operand.hbm [shape: f32[128,256], index: 10, kind: input, shape index: {}]
  %s11 = inlined_call_operand.vmem [shape: f32[1,256], index: 11, kind: input, shape index: {}]
  %s12 = inlined_call_operand.vmem [shape: f32[8,256], index: 12, kind: output, shape index: {}]
  %s13 = sld [smem:[#allocation0]]
  $region78: #{inference_forward.1} parent=0
    _
  %s15 = ssub.s32 1, %s13
  %s16 = scalar_select 0, %s15, %s13
  $region1: #{inference_forward.1} parent=0
    #allocation3 [shape = 'u8[65536]{0}', space=vmem, size = 0x10000, scoped, tag = 'input window, operand 2, single buffered']
    #allocation4 [shape = 's32[1]{0}', space=sflag, size = 0x4, scoped, tag = 'scoped memory for inference_forward.1']
    #allocation5 [shape = 'u8[131072]{0}', space=vmem, size = 0x20000, scoped, tag = 'input window, operand 4, single buffered']
    #allocation6 [shape = 's32[1]{0}', space=sflag, size = 0x4, scoped, tag = 'scoped memory for inference_forward.1']
    #allocation7 [shape = 'u8[65536]{0}', space=vmem, size = 0x10000, scoped, tag = 'input window, operand 6, single buffered']
    #allocation8 [shape = 'u8[65536]{0}', space=vmem, size = 0x10000, scoped, tag = 'input window, operand 8, single buffered']
    #allocation9 [shape = 's32[1]{0}', space=sflag, size = 0x4, scoped, tag = 'scoped memory for inference_forward.1']
    #allocation10 [shape = 'u8[131072]{0}', space=vmem, size = 0x20000, scoped, tag = 'input window, operand 10, single buffered']
    %17 = vsyncpa [#allocation4], 0
    %18 = vsyncpa [#allocation6], 0
    %19 = vsyncpa [#allocation9], 0
    // Predicated region
    $region2: #{inference_forward.1} parent=1 // pred_check
      _
    $region3: #{inference_forward.1} parent=1 // pred_check_branch
      %21 = sbr.rel (0) target = $region5
    $region4: #{inference_forward.1} parent=1 // pred_region
      _
    $region5: #{inference_forward.1} parent=1 // pred_fallthru
      _
    // Predicated region
    $region6: #{inference_forward.1} parent=1 // pred_check
      _
    $region7: #{inference_forward.1} parent=1 // pred_check_branch
      %23 = sbr.rel (0) target = $region9
    $region8: #{inference_forward.1} parent=1 // pred_region
      _
    $region9: #{inference_forward.1} parent=1 // pred_fallthru
      _
    // Predicated region
    $region10: #{inference_forward.1} parent=1 // pred_check
      _
    $region11: #{inference_forward.1} parent=1 // pred_check_branch
      %25 = sbr.rel (0) target = $region13
    $region12: #{inference_forward.1} parent=1 // pred_region
      %s27 = ssub.s32 2048, 2048
      %28 = vsyncadd [#allocation4], %s27
      %s29 = sshll.u32 [#allocation3], 4
      %s30 = int_to_ptr.vmem [resolvable:$true] %s29
      %35 = dma.hbm_to_vmem [thread:$0]  %s2, 2048, %s30, [#allocation4], 128, 128, 8
    $region13: #{inference_forward.1} parent=1 // pred_fallthru
      _
    // Predicated region
    $region14: #{inference_forward.1} parent=1 // pred_check
      _
    $region15: #{inference_forward.1} parent=1 // pred_check_branch
      %37 = sbr.rel (0) target = $region17
    $region16: #{inference_forward.1} parent=1 // pred_region
      _
    $region17: #{inference_forward.1} parent=1 // pred_fallthru
      _
    // Predicated region
    $region18: #{inference_forward.1} parent=1 // pred_check
      _
    $region19: #{inference_forward.1} parent=1 // pred_check_branch
      %39 = sbr.rel (0) target = $region21
    $region20: #{inference_forward.1} parent=1 // pred_region
      %s41 = ssub.s32 4096, 4096
      %42 = vsyncadd [#allocation6], %s41
      %s43 = sshll.u32 [#allocation5], 4
      %s44 = int_to_ptr.vmem [resolvable:$true] %s43
      %49 = dma.hbm_to_vmem [thread:$0]  %s4, 4096, %s44, [#allocation6], 128, 128, 8
    $region21: #{inference_forward.1} parent=1 // pred_fallthru
      _
    // Predicated region
    $region22: #{inference_forward.1} parent=1 // pred_check
      _
    $region23: #{inference_forward.1} parent=1 // pred_check_branch
      %51 = sbr.rel (0) target = $region25
    $region24: #{inference_forward.1} parent=1 // pred_region
      _
    $region25: #{inference_forward.1} parent=1 // pred_fallthru
      _
    // Predicated region
    $region26: #{inference_forward.1} parent=1 // pred_check
      _
    $region27: #{inference_forward.1} parent=1 // pred_check_branch
      %53 = sbr.rel (0) target = $region29
    $region28: #{inference_forward.1} parent=1 // pred_region
      %s55 = ssub.s32 2048, 2048
      %56 = vsyncadd [#allocation6], %s55
      %s57 = sshll.u32 [#allocation7], 4
      %s58 = int_to_ptr.vmem [resolvable:$true] %s57
      %63 = dma.hbm_to_vmem [thread:$0]  %s6, 2048, %s58, [#allocation6], 128, 128, 8
    $region29: #{inference_forward.1} parent=1 // pred_fallthru
      _
    // Predicated region
    $region30: #{inference_forward.1} parent=1 // pred_check
      _
    $region31: #{inference_forward.1} parent=1 // pred_check_branch
      %65 = sbr.rel (0) target = $region33
    $region32: #{inference_forward.1} parent=1 // pred_region
      _
    $region33: #{inference_forward.1} parent=1 // pred_fallthru
      _
    // Predicated region
    $region34: #{inference_forward.1} parent=1 // pred_check
      _
    $region35: #{inference_forward.1} parent=1 // pred_check_branch
      %67 = sbr.rel (0) target = $region37
    $region36: #{inference_forward.1} parent=1 // pred_region
      %s69 = ssub.s32 2048, 2048
      %70 = vsyncadd [#allocation9], %s69
      %s71 = sshll.u32 [#allocation8], 4
      %s72 = int_to_ptr.vmem [resolvable:$true] %s71
      %77 = dma.hbm_to_vmem [thread:$0]  %s8, 2048, %s72, [#allocation9], 128, 128, 8
    $region37: #{inference_forward.1} parent=1 // pred_fallthru
      _
    // Predicated region
    $region38: #{inference_forward.1} parent=1 // pred_check
      _
    $region39: #{inference_forward.1} parent=1 // pred_check_branch
      %79 = sbr.rel (0) target = $region41
    $region40: #{inference_forward.1} parent=1 // pred_region
      _
    $region41: #{inference_forward.1} parent=1 // pred_fallthru
      _
    // Predicated region
    $region42: #{inference_forward.1} parent=1 // pred_check
      _
    $region43: #{inference_forward.1} parent=1 // pred_check_branch
      %81 = sbr.rel (0) target = $region45
    $region44: #{inference_forward.1} parent=1 // pred_region
      %s83 = ssub.s32 4096, 4096
      %84 = vsyncadd [#allocation9], %s83
      %s85 = sshll.u32 [#allocation10], 4
      %s86 = int_to_ptr.vmem [resolvable:$true] %s85
      %91 = dma.hbm_to_vmem [thread:$0]  %s10, 4096, %s86, [#allocation9], 256, 256, 16
    $region45: #{inference_forward.1} parent=1 // pred_fallthru
      _
    // Predicated region
    $region46: #{inference_forward.1} parent=1 // pred_check
      _
    $region47: #{inference_forward.1} parent=1 // pred_check_branch
      %93 = sbr.rel (0) target = $region49
    $region48: #{inference_forward.1} parent=1 // pred_region
      _
    $region49: #{inference_forward.1} parent=1 // pred_fallthru
      _
    // Predicated region
    $region50: #{inference_forward.1} parent=1 // pred_check
      _
    $region51: #{inference_forward.1} parent=1 // pred_check_branch
      %95 = sbr.rel (0) target = $region53
    $region52: #{inference_forward.1} parent=1 // pred_region
      %96 = dma.done [#allocation4], 2048
    $region53: #{inference_forward.1} parent=1 // pred_fallthru
      _
    // Predicated region
    $region54: #{inference_forward.1} parent=1 // pred_check
      _
    $region55: #{inference_forward.1} parent=1 // pred_check_branch
      %98 = sbr.rel (0) target = $region57
    $region56: #{inference_forward.1} parent=1 // pred_region
      %99 = dma.done [#allocation6], 4096
    $region57: #{inference_forward.1} parent=1 // pred_fallthru
      _
    // Predicated region
    $region58: #{inference_forward.1} parent=1 // pred_check
      _
    $region59: #{inference_forward.1} parent=1 // pred_check_branch
      %101 = sbr.rel (0) target = $region61
    $region60: #{inference_forward.1} parent=1 // pred_region
      %102 = dma.done [#allocation6], 2048
    $region61: #{inference_forward.1} parent=1 // pred_fallthru
      _
    // Predicated region
    $region62: #{inference_forward.1} parent=1 // pred_check
      _
    $region63: #{inference_forward.1} parent=1 // pred_check_branch
      %104 = sbr.rel (0) target = $region65
    $region64: #{inference_forward.1} parent=1 // pred_region
      %105 = dma.done [#allocation9], 2048
    $region65: #{inference_forward.1} parent=1 // pred_fallthru
      _
    // Predicated region
    $region66: #{inference_forward.1} parent=1 // pred_check
      _
    $region67: #{inference_forward.1} parent=1 // pred_check_branch
      %107 = sbr.rel (0) target = $region69
    $region68: #{inference_forward.1} parent=1 // pred_region
      %108 = dma.done [#allocation9], 4096
    $region69: #{inference_forward.1} parent=1 // pred_fallthru
      _
    %v109 = vld [vmem:[%s0] sm:$0xff]
    %v110 = vld [vmem:[#allocation3] sm:$0xff]
    %v111 = vld [vmem:[#allocation3 + $0x8] sm:$0xff]
    %v112 = vld [vmem:[#allocation3 + $0x10] sm:$0xff]
    %v113 = vld [vmem:[#allocation3 + $0x18] sm:$0xff]
    %v114 = vld [vmem:[#allocation3 + $0x20] sm:$0xff]
    %v115 = vld [vmem:[#allocation3 + $0x28] sm:$0xff]
    %v116 = vld [vmem:[#allocation3 + $0x30] sm:$0xff]
    %v117 = vld [vmem:[#allocation3 + $0x38] sm:$0xff]
    %v118 = vld [vmem:[#allocation3 + $0x40] sm:$0xff]
    %v119 = vld [vmem:[#allocation3 + $0x48] sm:$0xff]
    %v120 = vld [vmem:[#allocation3 + $0x50] sm:$0xff]
    %v121 = vld [vmem:[#allocation3 + $0x58] sm:$0xff]
    %v122 = vld [vmem:[#allocation3 + $0x60] sm:$0xff]
    %v123 = vld [vmem:[#allocation3 + $0x68] sm:$0xff]
    %v124 = vld [vmem:[#allocation3 + $0x70] sm:$0xff]
    %v125 = vld [vmem:[#allocation3 + $0x78] sm:$0xff]
    %v126 = vld [vmem:[%s3] sm:$0x1]
    %v128 = vlaneseq
    %v129 = vshrl.u32 %v128, 7
    %v130 = vsub.s32 0, %v129
    %v131 = vrot.slane %v126, %v130
    %133 = vmatprep.subr.mxu0 0.0
    %134 = vmatpush1.msra.mxu0 %v125
    %135 = vmatprep.subr.mxu0 0.0
    %136 = vmatpush1.msra.mxu0 %v124
    %137 = vmatprep.subr.mxu0 0.0
    %138 = vmatpush1.msra.mxu0 %v123
    %139 = vmatprep.subr.mxu0 0.0
    %140 = vmatpush1.msra.mxu0 %v122
    %141 = vmatprep.subr.mxu0 0.0
    %142 = vmatpush1.msra.mxu0 %v121
    %143 = vmatprep.subr.mxu0 0.0
    %144 = vmatpush1.msra.mxu0 %v120
    %145 = vmatprep.subr.mxu0 0.0
    %146 = vmatpush1.msra.mxu0 %v119
    %147 = vmatprep.subr.mxu0 0.0
    %148 = vmatpush1.msra.mxu0 %v118
    %149 = vmatprep.subr.mxu0 0.0
    %150 = vmatpush1.msra.mxu0 %v117
    %151 = vmatprep.subr.mxu0 0.0
    %152 = vmatpush1.msra.mxu0 %v116
    %153 = vmatprep.subr.mxu0 0.0
    %154 = vmatpush1.msra.mxu0 %v115
    %155 = vmatprep.subr.mxu0 0.0
    %156 = vmatpush1.msra.mxu0 %v114
    %157 = vmatprep.subr.mxu0 0.0
    %158 = vmatpush1.msra.mxu0 %v113
    %159 = vmatprep.subr.mxu0 0.0
    %160 = vmatpush1.msra.mxu0 %v112
    %161 = vmatprep.subr.mxu0 0.0
    %162 = vmatpush1.msra.mxu0 %v111
    %163 = vmatprep.subr.mxu0 0.0
    %164 = vmatpush1.msra.mxu0 %v110
    %165 = vmatprep.subr.mxu0 0.0
    %166 = vmatpush2.msra.mxu0 0.0
    %167 = vmatprep.subr.mxu0 0.0
    %168 = vmatpush2.msra.mxu0 0.0
    %169 = vmatprep.subr.mxu0 0.0
    %170 = vmatpush2.msra.mxu0 0.0
    %171 = vmatprep.subr.mxu0 0.0
    %172 = vmatpush2.msra.mxu0 0.0
    %173 = vmatprep.subr.mxu0 0.0
    %174 = vmatpush2.msra.mxu0 0.0
    %175 = vmatprep.subr.mxu0 0.0
    %176 = vmatpush2.msra.mxu0 0.0
    %177 = vmatprep.subr.mxu0 0.0
    %178 = vmatpush2.msra.mxu0 0.0
    %179 = vmatprep.subr.mxu0 0.0
    %180 = vmatpush2.msra.mxu0 0.0
    %181 = vmatprep.subr.mxu0 0.0
    %182 = vmatpush2.msra.mxu0 0.0
    %183 = vmatprep.subr.mxu0 0.0
    %184 = vmatpush2.msra.mxu0 0.0
    %185 = vmatprep.subr.mxu0 0.0
    %186 = vmatpush2.msra.mxu0 0.0
    %187 = vmatprep.subr.mxu0 0.0
    %188 = vmatpush2.msra.mxu0 0.0
    %189 = vmatprep.subr.mxu0 0.0
    %190 = vmatpush2.msra.mxu0 0.0
    %191 = vmatprep.subr.mxu0 0.0
    %192 = vmatpush2.msra.mxu0 0.0
    %193 = vmatprep.subr.mxu0 0.0
    %194 = vmatpush2.msra.mxu0 0.0
    %195 = vmatprep.subr.mxu0 0.0
    %196 = vmatpush2.msra.mxu0 0.0
    %197 = vmatprep.mubr.f32.mxu0 0.0
    %198 = vmatmul.mubr.f32.gmra.mxu0 %v109
    %v199 = vpop.f32.mrf.mxu0
    %v200 = vadd.f32 %v131, %v199
    %v201 = vpop.f32.mrf.mxu0
    %202 = vdwg.mxu0
    %v203 = vtanh.pop %v200
    %204 = vst [vmem:[#allocation2] sm:$0xff] %v203
    %v205 = vld [vmem:[%s1] sm:$0xff]
    %206 = vst [vmem:[#allocation2 + $0x8] sm:$0xff] %v205
    %v207 = vld [vmem:[#allocation2] sm:$0xff]
    %v208 = vld [vmem:[#allocation2 + $0x8] sm:$0xff]
    %v209 = vld [vmem:[#allocation5] sm:$0xff]
    %v210 = vld [vmem:[#allocation5 + $0x8] sm:$0xff]
    %v211 = vld [vmem:[#allocation5 + $0x10] sm:$0xff]
    %v212 = vld [vmem:[#allocation5 + $0x18] sm:$0xff]
    %v213 = vld [vmem:[#allocation5 + $0x20] sm:$0xff]
    %v214 = vld [vmem:[#allocation5 + $0x28] sm:$0xff]
    %v215 = vld [vmem:[#allocation5 + $0x30] sm:$0xff]
    %v216 = vld [vmem:[#allocation5 + $0x38] sm:$0xff]
    %v217 = vld [vmem:[#allocation5 + $0x40] sm:$0xff]
    %v218 = vld [vmem:[#allocation5 + $0x48] sm:$0xff]
    %v219 = vld [vmem:[#allocation5 + $0x50] sm:$0xff]
    %v220 = vld [vmem:[#allocation5 + $0x58] sm:$0xff]
    %v221 = vld [vmem:[#allocation5 + $0x60] sm:$0xff]
    %v222 = vld [vmem:[#allocation5 + $0x68] sm:$0xff]
    %v223 = vld [vmem:[#allocation5 + $0x70] sm:$0xff]
    %v224 = vld [vmem:[#allocation5 + $0x78] sm:$0xff]
    %v225 = vld [vmem:[#allocation5 + $0x80] sm:$0xff]
    %v226 = vld [vmem:[#allocation5 + $0x88] sm:$0xff]
    %v227 = vld [vmem:[#allocation5 + $0x90] sm:$0xff]
    %v228 = vld [vmem:[#allocation5 + $0x98] sm:$0xff]
    %v229 = vld [vmem:[#allocation5 + $0xa0] sm:$0xff]
    %v230 = vld [vmem:[#allocation5 + $0xa8] sm:$0xff]
    %v231 = vld [vmem:[#allocation5 + $0xb0] sm:$0xff]
    %v232 = vld [vmem:[#allocation5 + $0xb8] sm:$0xff]
    %v233 = vld [vmem:[#allocation5 + $0xc0] sm:$0xff]
    %v234 = vld [vmem:[#allocation5 + $0xc8] sm:$0xff]
    %v235 = vld [vmem:[#allocation5 + $0xd0] sm:$0xff]
    %v236 = vld [vmem:[#allocation5 + $0xd8] sm:$0xff]
    %v237 = vld [vmem:[#allocation5 + $0xe0] sm:$0xff]
    %v238 = vld [vmem:[#allocation5 + $0xe8] sm:$0xff]
    %v239 = vld [vmem:[#allocation5 + $0xf0] sm:$0xff]
    %v240 = vld [vmem:[#allocation5 + $0xf8] sm:$0xff]
    %v241 = vld [vmem:[%s5] sm:$0x1]
    %v243 = vlaneseq
    %v244 = vshrl.u32 %v243, 7
    %v245 = vsub.s32 0, %v244
    %v246 = vrot.slane %v241, %v245
    %248 = vmatprep.subr.mxu0 0.0
    %249 = vmatpush1.msra.mxu0 %v224
    %250 = vmatprep.subr.mxu0 0.0
    %251 = vmatpush1.msra.mxu0 %v223
    %252 = vmatprep.subr.mxu0 0.0
    %253 = vmatpush1.msra.mxu0 %v222
    %254 = vmatprep.subr.mxu0 0.0
    %255 = vmatpush1.msra.mxu0 %v221
    %256 = vmatprep.subr.mxu0 0.0
    %257 = vmatpush1.msra.mxu0 %v220
    %258 = vmatprep.subr.mxu0 0.0
    %259 = vmatpush1.msra.mxu0 %v219
    %260 = vmatprep.subr.mxu0 0.0
    %261 = vmatpush1.msra.mxu0 %v218
    %262 = vmatprep.subr.mxu0 0.0
    %263 = vmatpush1.msra.mxu0 %v217
    %264 = vmatprep.subr.mxu0 0.0
    %265 = vmatpush1.msra.mxu0 %v216
    %266 = vmatprep.subr.mxu0 0.0
    %267 = vmatpush1.msra.mxu0 %v215
    %268 = vmatprep.subr.mxu0 0.0
    %269 = vmatpush1.msra.mxu0 %v214
    %270 = vmatprep.subr.mxu0 0.0
    %271 = vmatpush1.msra.mxu0 %v213
    %272 = vmatprep.subr.mxu0 0.0
    %273 = vmatpush1.msra.mxu0 %v212
    %274 = vmatprep.subr.mxu0 0.0
    %275 = vmatpush1.msra.mxu0 %v211
    %276 = vmatprep.subr.mxu0 0.0
    %277 = vmatpush1.msra.mxu0 %v210
    %278 = vmatprep.subr.mxu0 0.0
    %279 = vmatpush1.msra.mxu0 %v209
    %280 = vmatprep.subr.mxu0 0.0
    %281 = vmatpush2.msra.mxu0 %v240
    %282 = vmatprep.subr.mxu0 0.0
    %283 = vmatpush2.msra.mxu0 %v239
    %284 = vmatprep.subr.mxu0 0.0
    %285 = vmatpush2.msra.mxu0 %v238
    %286 = vmatprep.subr.mxu0 0.0
    %287 = vmatpush2.msra.mxu0 %v237
    %288 = vmatprep.subr.mxu0 0.0
    %289 = vmatpush2.msra.mxu0 %v236
    %290 = vmatprep.subr.mxu0 0.0
    %291 = vmatpush2.msra.mxu0 %v235
    %292 = vmatprep.subr.mxu0 0.0
    %293 = vmatpush2.msra.mxu0 %v234
    %294 = vmatprep.subr.mxu0 0.0
    %295 = vmatpush2.msra.mxu0 %v233
    %296 = vmatprep.subr.mxu0 0.0
    %297 = vmatpush2.msra.mxu0 %v232
    %298 = vmatprep.subr.mxu0 0.0
    %299 = vmatpush2.msra.mxu0 %v231
    %300 = vmatprep.subr.mxu0 0.0
    %301 = vmatpush2.msra.mxu0 %v230
    %302 = vmatprep.subr.mxu0 0.0
    %303 = vmatpush2.msra.mxu0 %v229
    %304 = vmatprep.subr.mxu0 0.0
    %305 = vmatpush2.msra.mxu0 %v228
    %306 = vmatprep.subr.mxu0 0.0
    %307 = vmatpush2.msra.mxu0 %v227
    %308 = vmatprep.subr.mxu0 0.0
    %309 = vmatpush2.msra.mxu0 %v226
    %310 = vmatprep.subr.mxu0 0.0
    %311 = vmatpush2.msra.mxu0 %v225
    %312 = vmatprep.mubr.f32.mxu0 %v208
    %313 = vmatmul.mubr.f32.gmra.mxu0 %v207
    %v314 = vpop.f32.mrf.mxu0
    %v315 = vadd.f32 %v246, %v314
    %v316 = vpop.f32.mrf.mxu0
    %317 = vdwg.mxu0
    %v318 = vtanh.pop %v315
    %v319 = vld [vmem:[#allocation7] sm:$0xff]
    %v320 = vld [vmem:[#allocation7 + $0x8] sm:$0xff]
    %v321 = vld [vmem:[#allocation7 + $0x10] sm:$0xff]
    %v322 = vld [vmem:[#allocation7 + $0x18] sm:$0xff]
    %v323 = vld [vmem:[#allocation7 + $0x20] sm:$0xff]
    %v324 = vld [vmem:[#allocation7 + $0x28] sm:$0xff]
    %v325 = vld [vmem:[#allocation7 + $0x30] sm:$0xff]
    %v326 = vld [vmem:[#allocation7 + $0x38] sm:$0xff]
    %v327 = vld [vmem:[#allocation7 + $0x40] sm:$0xff]
    %v328 = vld [vmem:[#allocation7 + $0x48] sm:$0xff]
    %v329 = vld [vmem:[#allocation7 + $0x50] sm:$0xff]
    %v330 = vld [vmem:[#allocation7 + $0x58] sm:$0xff]
    %v331 = vld [vmem:[#allocation7 + $0x60] sm:$0xff]
    %v332 = vld [vmem:[#allocation7 + $0x68] sm:$0xff]
    %v333 = vld [vmem:[#allocation7 + $0x70] sm:$0xff]
    %v334 = vld [vmem:[#allocation7 + $0x78] sm:$0xff]
    %v335 = vld [vmem:[%s7] sm:$0x1]
    %v337 = vlaneseq
    %v338 = vshrl.u32 %v337, 7
    %v339 = vsub.s32 0, %v338
    %v340 = vrot.slane %v335, %v339
    %342 = vmatprep.subr.mxu0 0.0
    %343 = vmatpush1.msra.mxu0 %v334
    %344 = vmatprep.subr.mxu0 0.0
    %345 = vmatpush1.msra.mxu0 %v333
    %346 = vmatprep.subr.mxu0 0.0
    %347 = vmatpush1.msra.mxu0 %v332
    %348 = vmatprep.subr.mxu0 0.0
    %349 = vmatpush1.msra.mxu0 %v331
    %350 = vmatprep.subr.mxu0 0.0
    %351 = vmatpush1.msra.mxu0 %v330
    %352 = vmatprep.subr.mxu0 0.0
    %353 = vmatpush1.msra.mxu0 %v329
    %354 = vmatprep.subr.mxu0 0.0
    %355 = vmatpush1.msra.mxu0 %v328
    %356 = vmatprep.subr.mxu0 0.0
    %357 = vmatpush1.msra.mxu0 %v327
    %358 = vmatprep.subr.mxu0 0.0
    %359 = vmatpush1.msra.mxu0 %v326
    %360 = vmatprep.subr.mxu0 0.0
    %361 = vmatpush1.msra.mxu0 %v325
    %362 = vmatprep.subr.mxu0 0.0
    %363 = vmatpush1.msra.mxu0 %v324
    %364 = vmatprep.subr.mxu0 0.0
    %365 = vmatpush1.msra.mxu0 %v323
    %366 = vmatprep.subr.mxu0 0.0
    %367 = vmatpush1.msra.mxu0 %v322
    %368 = vmatprep.subr.mxu0 0.0
    %369 = vmatpush1.msra.mxu0 %v321
    %370 = vmatprep.subr.mxu0 0.0
    %371 = vmatpush1.msra.mxu0 %v320
    %372 = vmatprep.subr.mxu0 0.0
    %373 = vmatpush1.msra.mxu0 %v319
    %374 = vmatprep.subr.mxu0 0.0
    %375 = vmatpush2.msra.mxu0 0.0
    %376 = vmatprep.subr.mxu0 0.0
    %377 = vmatpush2.msra.mxu0 0.0
    %378 = vmatprep.subr.mxu0 0.0
    %379 = vmatpush2.msra.mxu0 0.0
    %380 = vmatprep.subr.mxu0 0.0
    %381 = vmatpush2.msra.mxu0 0.0
    %382 = vmatprep.subr.mxu0 0.0
    %383 = vmatpush2.msra.mxu0 0.0
    %384 = vmatprep.subr.mxu0 0.0
    %385 = vmatpush2.msra.mxu0 0.0
    %386 = vmatprep.subr.mxu0 0.0
    %387 = vmatpush2.msra.mxu0 0.0
    %388 = vmatprep.subr.mxu0 0.0
    %389 = vmatpush2.msra.mxu0 0.0
    %390 = vmatprep.subr.mxu0 0.0
    %391 = vmatpush2.msra.mxu0 0.0
    %392 = vmatprep.subr.mxu0 0.0
    %393 = vmatpush2.msra.mxu0 0.0
    %394 = vmatprep.subr.mxu0 0.0
    %395 = vmatpush2.msra.mxu0 0.0
    %396 = vmatprep.subr.mxu0 0.0
    %397 = vmatpush2.msra.mxu0 0.0
    %398 = vmatprep.subr.mxu0 0.0
    %399 = vmatpush2.msra.mxu0 0.0
    %400 = vmatprep.subr.mxu0 0.0
    %401 = vmatpush2.msra.mxu0 0.0
    %402 = vmatprep.subr.mxu0 0.0
    %403 = vmatpush2.msra.mxu0 0.0
    %404 = vmatprep.subr.mxu0 0.0
    %405 = vmatpush2.msra.mxu0 0.0
    %406 = vmatprep.mubr.f32.mxu0 0.0
    %407 = vmatmul.mubr.f32.gmra.mxu0 %v318
    %v408 = vpop.f32.mrf.mxu0
    %v409 = vadd.f32 %v340, %v408
    %v410 = vpop.f32.mrf.mxu0
    %411 = vdwg.mxu0
    %v412 = vtanh.pop %v409
    %v413 = vld [vmem:[#allocation8] sm:$0xff]
    %v414 = vld [vmem:[#allocation8 + $0x8] sm:$0xff]
    %v415 = vld [vmem:[#allocation8 + $0x10] sm:$0xff]
    %v416 = vld [vmem:[#allocation8 + $0x18] sm:$0xff]
    %v417 = vld [vmem:[#allocation8 + $0x20] sm:$0xff]
    %v418 = vld [vmem:[#allocation8 + $0x28] sm:$0xff]
    %v419 = vld [vmem:[#allocation8 + $0x30] sm:$0xff]
    %v420 = vld [vmem:[#allocation8 + $0x38] sm:$0xff]
    %v421 = vld [vmem:[#allocation8 + $0x40] sm:$0xff]
    %v422 = vld [vmem:[#allocation8 + $0x48] sm:$0xff]
    %v423 = vld [vmem:[#allocation8 + $0x50] sm:$0xff]
    %v424 = vld [vmem:[#allocation8 + $0x58] sm:$0xff]
    %v425 = vld [vmem:[#allocation8 + $0x60] sm:$0xff]
    %v426 = vld [vmem:[#allocation8 + $0x68] sm:$0xff]
    %v427 = vld [vmem:[#allocation8 + $0x70] sm:$0xff]
    %v428 = vld [vmem:[#allocation8 + $0x78] sm:$0xff]
    %v429 = vld [vmem:[%s9] sm:$0x1]
    %v431 = vlaneseq
    %v432 = vshrl.u32 %v431, 7
    %v433 = vsub.s32 0, %v432
    %v434 = vrot.slane %v429, %v433
    %436 = vmatprep.subr.mxu0 0.0
    %437 = vmatpush1.msra.mxu0 %v428
    %438 = vmatprep.subr.mxu0 0.0
    %439 = vmatpush1.msra.mxu0 %v427
    %440 = vmatprep.subr.mxu0 0.0
    %441 = vmatpush1.msra.mxu0 %v426
    %442 = vmatprep.subr.mxu0 0.0
    %443 = vmatpush1.msra.mxu0 %v425
    %444 = vmatprep.subr.mxu0 0.0
    %445 = vmatpush1.msra.mxu0 %v424
    %446 = vmatprep.subr.mxu0 0.0
    %447 = vmatpush1.msra.mxu0 %v423
    %448 = vmatprep.subr.mxu0 0.0
    %449 = vmatpush1.msra.mxu0 %v422
    %450 = vmatprep.subr.mxu0 0.0
    %451 = vmatpush1.msra.mxu0 %v421
    %452 = vmatprep.subr.mxu0 0.0
    %453 = vmatpush1.msra.mxu0 %v420
    %454 = vmatprep.subr.mxu0 0.0
    %455 = vmatpush1.msra.mxu0 %v419
    %456 = vmatprep.subr.mxu0 0.0
    %457 = vmatpush1.msra.mxu0 %v418
    %458 = vmatprep.subr.mxu0 0.0
    %459 = vmatpush1.msra.mxu0 %v417
    %460 = vmatprep.subr.mxu0 0.0
    %461 = vmatpush1.msra.mxu0 %v416
    %462 = vmatprep.subr.mxu0 0.0
    %463 = vmatpush1.msra.mxu0 %v415
    %464 = vmatprep.subr.mxu0 0.0
    %465 = vmatpush1.msra.mxu0 %v414
    %466 = vmatprep.subr.mxu0 0.0
    %467 = vmatpush1.msra.mxu0 %v413
    %468 = vmatprep.subr.mxu0 0.0
    %469 = vmatpush2.msra.mxu0 0.0
    %470 = vmatprep.subr.mxu0 0.0
    %471 = vmatpush2.msra.mxu0 0.0
    %472 = vmatprep.subr.mxu0 0.0
    %473 = vmatpush2.msra.mxu0 0.0
    %474 = vmatprep.subr.mxu0 0.0
    %475 = vmatpush2.msra.mxu0 0.0
    %476 = vmatprep.subr.mxu0 0.0
    %477 = vmatpush2.msra.mxu0 0.0
    %478 = vmatprep.subr.mxu0 0.0
    %479 = vmatpush2.msra.mxu0 0.0
    %480 = vmatprep.subr.mxu0 0.0
    %481 = vmatpush2.msra.mxu0 0.0
    %482 = vmatprep.subr.mxu0 0.0
    %483 = vmatpush2.msra.mxu0 0.0
    %484 = vmatprep.subr.mxu0 0.0
    %485 = vmatpush2.msra.mxu0 0.0
    %486 = vmatprep.subr.mxu0 0.0
    %487 = vmatpush2.msra.mxu0 0.0
    %488 = vmatprep.subr.mxu0 0.0
    %489 = vmatpush2.msra.mxu0 0.0
    %490 = vmatprep.subr.mxu0 0.0
    %491 = vmatpush2.msra.mxu0 0.0
    %492 = vmatprep.subr.mxu0 0.0
    %493 = vmatpush2.msra.mxu0 0.0
    %494 = vmatprep.subr.mxu0 0.0
    %495 = vmatpush2.msra.mxu0 0.0
    %496 = vmatprep.subr.mxu0 0.0
    %497 = vmatpush2.msra.mxu0 0.0
    %498 = vmatprep.subr.mxu0 0.0
    %499 = vmatpush2.msra.mxu0 0.0
    %500 = vmatprep.mubr.f32.mxu0 0.0
    %501 = vmatmul.mubr.f32.gmra.mxu0 %v412
    %v502 = vpop.f32.mrf.mxu0
    %v503 = vadd.f32 %v434, %v502
    %v504 = vpop.f32.mrf.mxu0
    %505 = vdwg.mxu0
    %v506 = vtanh.pop %v503
    %v507 = vld [vmem:[#allocation10] sm:$0xff]
    %v508 = vld [vmem:[#allocation10 + $0x8] sm:$0xff]
    %v509 = vld [vmem:[#allocation10 + $0x10] sm:$0xff]
    %v510 = vld [vmem:[#allocation10 + $0x18] sm:$0xff]
    %v511 = vld [vmem:[#allocation10 + $0x20] sm:$0xff]
    %v512 = vld [vmem:[#allocation10 + $0x28] sm:$0xff]
    %v513 = vld [vmem:[#allocation10 + $0x30] sm:$0xff]
    %v514 = vld [vmem:[#allocation10 + $0x38] sm:$0xff]
    %v515 = vld [vmem:[#allocation10 + $0x40] sm:$0xff]
    %v516 = vld [vmem:[#allocation10 + $0x48] sm:$0xff]
    %v517 = vld [vmem:[#allocation10 + $0x50] sm:$0xff]
    %v518 = vld [vmem:[#allocation10 + $0x58] sm:$0xff]
    %v519 = vld [vmem:[#allocation10 + $0x60] sm:$0xff]
    %v520 = vld [vmem:[#allocation10 + $0x68] sm:$0xff]
    %v521 = vld [vmem:[#allocation10 + $0x70] sm:$0xff]
    %v522 = vld [vmem:[#allocation10 + $0x78] sm:$0xff]
    %v523 = vld [vmem:[#allocation10 + $0x80] sm:$0xff]
    %v524 = vld [vmem:[#allocation10 + $0x88] sm:$0xff]
    %v525 = vld [vmem:[#allocation10 + $0x90] sm:$0xff]
    %v526 = vld [vmem:[#allocation10 + $0x98] sm:$0xff]
    %v527 = vld [vmem:[#allocation10 + $0xa0] sm:$0xff]
    %v528 = vld [vmem:[#allocation10 + $0xa8] sm:$0xff]
    %v529 = vld [vmem:[#allocation10 + $0xb0] sm:$0xff]
    %v530 = vld [vmem:[#allocation10 + $0xb8] sm:$0xff]
    %v531 = vld [vmem:[#allocation10 + $0xc0] sm:$0xff]
    %v532 = vld [vmem:[#allocation10 + $0xc8] sm:$0xff]
    %v533 = vld [vmem:[#allocation10 + $0xd0] sm:$0xff]
    %v534 = vld [vmem:[#allocation10 + $0xd8] sm:$0xff]
    %v535 = vld [vmem:[#allocation10 + $0xe0] sm:$0xff]
    %v536 = vld [vmem:[#allocation10 + $0xe8] sm:$0xff]
    %v537 = vld [vmem:[#allocation10 + $0xf0] sm:$0xff]
    %v538 = vld [vmem:[#allocation10 + $0xf8] sm:$0xff]
    %v539 = vld [vmem:[%s11] sm:$0x3]
    %v541 = vlaneseq
    %v542 = vshrl.u32 %v541, 7
    %v543 = vsub.s32 0, %v542
    %v544 = vrot.slane %v539, %v543
    %v545 = vlaneseq
    %v546 = vshrl.u32 %v545, 7
    %v547 = vsub.s32 1, %v546
    %v548 = vrot.slane %v539, %v547
    %551 = vmatprep.subr.mxu0 %v538
    %552 = vmatpush1.msra.mxu0 %v537
    %553 = vmatprep.subr.mxu0 %v536
    %554 = vmatpush1.msra.mxu0 %v535
    %555 = vmatprep.subr.mxu0 %v534
    %556 = vmatpush1.msra.mxu0 %v533
    %557 = vmatprep.subr.mxu0 %v532
    %558 = vmatpush1.msra.mxu0 %v531
    %559 = vmatprep.subr.mxu0 %v530
    %560 = vmatpush1.msra.mxu0 %v529
    %561 = vmatprep.subr.mxu0 %v528
    %562 = vmatpush1.msra.mxu0 %v527
    %563 = vmatprep.subr.mxu0 %v526
    %564 = vmatpush1.msra.mxu0 %v525
    %565 = vmatprep.subr.mxu0 %v524
    %566 = vmatpush1.msra.mxu0 %v523
    %567 = vmatprep.subr.mxu0 %v522
    %568 = vmatpush1.msra.mxu0 %v521
    %569 = vmatprep.subr.mxu0 %v520
    %570 = vmatpush1.msra.mxu0 %v519
    %571 = vmatprep.subr.mxu0 %v518
    %572 = vmatpush1.msra.mxu0 %v517
    %573 = vmatprep.subr.mxu0 %v516
    %574 = vmatpush1.msra.mxu0 %v515
    %575 = vmatprep.subr.mxu0 %v514
    %576 = vmatpush1.msra.mxu0 %v513
    %577 = vmatprep.subr.mxu0 %v512
    %578 = vmatpush1.msra.mxu0 %v511
    %579 = vmatprep.subr.mxu0 %v510
    %580 = vmatpush1.msra.mxu0 %v509
    %581 = vmatprep.subr.mxu0 %v508
    %582 = vmatpush1.msra.mxu0 %v507
    %583 = vmatprep.subr.mxu0 0.0
    %584 = vmatpush2.msra.mxu0 0.0
    %585 = vmatprep.subr.mxu0 0.0
    %586 = vmatpush2.msra.mxu0 0.0
    %587 = vmatprep.subr.mxu0 0.0
    %588 = vmatpush2.msra.mxu0 0.0
    %589 = vmatprep.subr.mxu0 0.0
    %590 = vmatpush2.msra.mxu0 0.0
    %591 = vmatprep.subr.mxu0 0.0
    %592 = vmatpush2.msra.mxu0 0.0
    %593 = vmatprep.subr.mxu0 0.0
    %594 = vmatpush2.msra.mxu0 0.0
    %595 = vmatprep.subr.mxu0 0.0
    %596 = vmatpush2.msra.mxu0 0.0
    %597 = vmatprep.subr.mxu0 0.0
    %598 = vmatpush2.msra.mxu0 0.0
    %599 = vmatprep.subr.mxu0 0.0
    %600 = vmatpush2.msra.mxu0 0.0
    %601 = vmatprep.subr.mxu0 0.0
    %602 = vmatpush2.msra.mxu0 0.0
    %603 = vmatprep.subr.mxu0 0.0
    %604 = vmatpush2.msra.mxu0 0.0
    %605 = vmatprep.subr.mxu0 0.0
    %606 = vmatpush2.msra.mxu0 0.0
    %607 = vmatprep.subr.mxu0 0.0
    %608 = vmatpush2.msra.mxu0 0.0
    %609 = vmatprep.subr.mxu0 0.0
    %610 = vmatpush2.msra.mxu0 0.0
    %611 = vmatprep.subr.mxu0 0.0
    %612 = vmatpush2.msra.mxu0 0.0
    %613 = vmatprep.subr.mxu0 0.0
    %614 = vmatpush2.msra.mxu0 0.0
    %615 = vmatprep.mubr.f32.mxu0 0.0
    %616 = vmatmul.mubr.f32.gmra.mxu0 %v506
    %v617 = vpop.f32.mrf.mxu0
    %v618 = vadd.f32 %v544, %v617
    %v619 = vpop.f32.mrf.mxu0
    %v620 = vadd.f32 %v548, %v619
    %621 = vdwg.mxu0
    %v622 = vrcp.pop 10.0
    %v623 = vmul.f32 %v618, %v622
    %v624 = vtanh.pop %v623
    %v625 = vmul.f32 %v624, 10.0
    %626 = vst [vmem:[%s12] sm:$0xff] %v625
    %v627 = vxor.u32 %v620, 2147483648
    %v628 = vmul.f32 %v627, 1.442695
    %v629 = vpow.pop %v628
    %v630 = vadd.f32 %v629, 1.0
    %v631 = vrcp.pop %v630
    %v632 = vmul.f32 1.0, %v631
    %v633 = vadd.f32 %v632, 1e-06
    %634 = vst [vmem:[%s12 + $0x8] sm:$0xff] %v633
    // Predicated region
    $region70: #{inference_forward.1} parent=1 // pred_check
      _
    $region71: #{inference_forward.1} parent=1 // pred_check_branch
      %636 = sbr.rel (0) target = $region73
    $region72: #{inference_forward.1} parent=1 // pred_region
      _
    $region73: #{inference_forward.1} parent=1 // pred_fallthru
      _
    // Predicated region
    $region74: #{inference_forward.1} parent=1 // pred_check
      _
    $region75: #{inference_forward.1} parent=1 // pred_check_branch
      %638 = sbr.rel (0) target = $region77
    $region76: #{inference_forward.1} parent=1 // pred_region
      _
    $region77: #{inference_forward.1} parent=1 // pred_fallthru
      _
    %639 = vsyncpa [#allocation4], 1
    %640 = vsyncpa [#allocation6], 1
    %641 = vsyncpa [#allocation9], 1

</llo_original>
